<compile_context>
chip_gen: v7x
topology: tpu7x:2x2x1
jax: 0.10.0
libtpu: 0.0.40
codegen_flags: <defaults>
</compile_context>

<pallas_src>
import functools

import jax
import jax.numpy as jnp
from jax.experimental import pallas as pl
from jax.experimental.pallas import tpu as pltpu

EMB_DIM = 384       # all-MiniLM-L6-v2 embedding dim
H1 = 512
H2 = 256
NUM_CLASSES = 10
OUT_PAD = 128       # lane-dense padded logit width (>= NUM_CLASSES, multiple of 128)
BN_EPS = 1e-5

# Above 2*_MIN_SPLIT_ROWS padded rows the grid is forced to >=2 batch tiles so the
# "parallel" axis can shard across v7x's two TensorCores (costs one extra ~0.35us
# grid step on single-TC chips, negligible at that size).
_MIN_SPLIT_ROWS = 64


def _round_up(n, m):
    return -(-n // m) * m


def _default_act_dtype():
    """bf16 elementwise epilogue on chips with a bf16 VPU (v6e/v7x), f32 otherwise."""
    try:
        kind = jax.devices()[0].device_kind.lower()
    except Exception:
        return jnp.bfloat16
    if any(t in kind for t in ("v2", "v3", "v4", "v5")):
        return jnp.float32
    return jnp.bfloat16


def _mlp_kernel(x_ref,
                w1_ref, b1_ref,
                w2_ref, b2_ref,
                w3_ref, b3_ref,
                o_ref, *, act_dtype):
    """Fused 3-layer MLP head: Linear->ReLU -> Linear->ReLU -> Linear.

    BatchNorm is pre-folded into the downstream weights; Dropout is identity at
    inference.  bf16 MXU operands, f32 accumulation, elementwise epilogue in
    `act_dtype` (bf16 on v6e/v7x, f32 on v5e), bf16 lane-dense output store.
    """
    x = x_ref[...].astype(jnp.bfloat16)   # no-op when embeddings arrive in bf16

    # Layer 1: Linear(EMB_DIM, 512) + ReLU   (BN1 folded into layer-2 weights)
    h = jnp.dot(x, w1_ref[...], preferred_element_type=jnp.float32) + b1_ref[...]
    h = jnp.maximum(h.astype(act_dtype), 0).astype(jnp.bfloat16)

    # Layer 2: Linear(512, 256) + ReLU       (BN2 folded into layer-3 weights)
    h = jnp.dot(h, w2_ref[...], preferred_element_type=jnp.float32) + b2_ref[...]
    h = jnp.maximum(h.astype(act_dtype), 0).astype(jnp.bfloat16)

    # Layer 3: Linear(256, OUT_PAD)  (zero-padded classes -> unmasked lane-dense store)
    o_ref[...] = (jnp.dot(h, w3_ref[...], preferred_element_type=jnp.float32)
                  + b3_ref[...]).astype(o_ref.dtype)


@functools.partial(jax.jit, static_argnames=("tile_b", "act_dtype"))
def embedding_classifier_forward(x, params, tile_b=512, act_dtype=None):
    """x: (B, EMB_DIM) bf16 (preferred) or f32 embeddings.
    Returns (B, NUM_CLASSES) f32 logits."""
    B, D = x.shape
    assert D == EMB_DIM
    if act_dtype is None:
        act_dtype = _default_act_dtype()
    w1, b1, w2, b2, w3, b3 = params

    # --- batch tiling -----------------------------------------------------
    # Pad only to a multiple of 8 per tile (waste < 8 rows/tile), never to a
    # full tile.  Force >= 2 tiles for moderately large batches so v7x's two
    # TensorCores both get work on the "parallel" axis.
    B8 = _round_up(B, 8)
    n_tiles = pl.cdiv(B8, tile_b)
    if B8 >= 2 * _MIN_SPLIT_ROWS:
        n_tiles = max(n_tiles, 2)
    tb = _round_up(pl.cdiv(B8, n_tiles), 8)
    B_pad = n_tiles * tb
    if B_pad != B:
        x = jnp.pad(x, ((0, B_pad - B), (0, 0)))

    args = (x, w1, b1, w2, b2, w3, b3)
    full = lambda arr: pl.BlockSpec(arr.shape, lambda i: (0, 0))
    in_specs = [pl.BlockSpec((tb, D), lambda i: (i, 0))] + [full(a) for a in args[1:]]

    out = pl.pallas_call(
        functools.partial(_mlp_kernel, act_dtype=act_dtype),
        out_shape=jax.ShapeDtypeStruct((B_pad, OUT_PAD), jnp.bfloat16),
        grid=(n_tiles,),
        in_specs=in_specs,
        out_specs=pl.BlockSpec((tb, OUT_PAD), lambda i: (i, 0)),
        compiler_params=pltpu.CompilerParams(dimension_semantics=("parallel",)),
    )(*args)

    # NOTE: a production dispatcher could route tiny batches (B < ~64) through
    # plain XLA to skip the fixed pallas_call overhead; kept on the Pallas path
    # here so the kernel is always exercised.
    return out[:B, :NUM_CLASSES].astype(jnp.float32)


def init_raw_params(key):
    """Deterministic synthetic parameters matching the PyTorch module shapes."""
    ks = jax.random.split(key, 11)

    def linear(kw, fan_in, fan_out):
        bound = 1.0 / jnp.sqrt(fan_in)
        w = jax.random.uniform(kw, (fan_in, fan_out), jnp.float32, -bound, bound)
        b = jnp.zeros((fan_out,), jnp.float32)
        return w, b

    w1, b1 = linear(ks[0], EMB_DIM, H1)
    w2, b2 = linear(ks[1], H1, H2)
    w3, b3 = linear(ks[2], H2, NUM_CLASSES)

    def bn(kg, kb, km, kv, n):
        gamma = 1.0 + 0.1 * jax.random.normal(kg, (n,), jnp.float32)
        beta = 0.1 * jax.random.normal(kb, (n,), jnp.float32)
        mean = 0.05 * jax.random.normal(km, (n,), jnp.float32)
        var = jnp.abs(1.0 + 0.1 * jax.random.normal(kv, (n,), jnp.float32))
        return gamma, beta, mean, var

    g1, be1, m1, v1 = bn(ks[3], ks[4], ks[5], ks[6], H1)
    g2, be2, m2, v2 = bn(ks[7], ks[8], ks[9], ks[10], H2)

    return (w1, b1, g1, be1, m1, v1, w2, b2, g2, be2, m2, v2, w3, b3)


def prepare_params(raw):
    """Fold eval-mode BatchNorm into the downstream Linear weights, pad the
    classifier to 128 output lanes, cast weights to bf16 (biases stay f32 rows)."""
    (w1, b1, g1, be1, m1, v1, w2, b2, g2, be2, m2, v2, w3, b3) = raw

    s1 = g1 / jnp.sqrt(v1 + BN_EPS)
    t1 = be1 - m1 * s1
    s2 = g2 / jnp.sqrt(v2 + BN_EPS)
    t2 = be2 - m2 * s2

    # BN1(h) @ W2 + b2 = h @ (s1[:,None]*W2) + (b2 + t1 @ W2)   (Dropout = identity)
    w2f = s1[:, None] * w2
    b2f = b2 + t1 @ w2
    # BN2 folded into layer 3.
    w3f = s2[:, None] * w3
    b3f = b3 + t2 @ w3

    # Zero-pad classifier to a lane-dense width (padded columns exactly zero).
    w3p = jnp.zeros((H2, OUT_PAD), jnp.float32).at[:, :NUM_CLASSES].set(w3f)
    b3p = jnp.zeros((OUT_PAD,), jnp.float32).at[:NUM_CLASSES].set(b3f)

    return (w1.astype(jnp.bfloat16), b1.reshape(1, -1),
            w2f.astype(jnp.bfloat16), b2f.reshape(1, -1),
            w3p.astype(jnp.bfloat16), b3p.reshape(1, -1))


def reference_forward_raw(x, raw):
    """Unfolded f32 reference: explicit Linear / ReLU / BatchNorm(eval) / Dropout(id)."""
    (w1, b1, g1, be1, m1, v1, w2, b2, g2, be2, m2, v2, w3, b3) = raw
    h = x.astype(jnp.float32)
    h = jnp.maximum(h @ w1 + b1, 0.0)
    h = (h - m1) / jnp.sqrt(v1 + BN_EPS) * g1 + be1
    h = jnp.maximum(h @ w2 + b2, 0.0)
    h = (h - m2) / jnp.sqrt(v2 + BN_EPS) * g2 + be2
    return h @ w3 + b3


def reference_forward_folded(x, params, act_dtype):
    """Same math path as the kernel (folded bf16 weights, f32 accumulation)."""
    w1, b1, w2, b2, w3, b3 = params
    h = jnp.dot(x.astype(jnp.bfloat16), w1, preferred_element_type=jnp.float32) + b1
    h = jnp.maximum(h.astype(act_dtype), 0).astype(jnp.bfloat16)
    h = jnp.dot(h, w2, preferred_element_type=jnp.float32) + b2
    h = jnp.maximum(h.astype(act_dtype), 0).astype(jnp.bfloat16)
    o = (jnp.dot(h, w3, preferred_element_type=jnp.float32) + b3).astype(jnp.bfloat16)
    return o[:, :NUM_CLASSES].astype(jnp.float32)


if __name__ == "__main__":
    key = jax.random.PRNGKey(0)
    k_param, k_x1, k_x2 = jax.random.split(key, 3)

    raw = init_raw_params(k_param)
    params = prepare_params(raw)
    act_dtype = _default_act_dtype()

    # TODO(synk): SentenceTransformer('all-MiniLM-L6-v2').encode(texts) has no
    # Pallas equivalent; synthetic bf16 embeddings stand in for the encoder output.
    x = jax.random.normal(k_x1, (16, EMB_DIM), jnp.bfloat16)
    logits = jax.block_until_ready(
        embedding_classifier_forward(x, params, act_dtype=act_dtype))
    assert logits.shape == (16, NUM_CLASSES)
    ref_raw = reference_forward_raw(x, raw)
    ref_folded = reference_forward_folded(x, params, act_dtype)
    assert jnp.allclose(logits, ref_raw, atol=5e-2, rtol=5e-2), "mismatch vs raw reference"
    assert jnp.allclose(logits, ref_folded, atol=1e-2, rtol=1e-2), "mismatch vs folded reference"

    # Ragged multi-tile batch: 300 rows -> padded to 304, split into 2 tiles of 152.
    x2 = jax.random.normal(k_x2, (300, EMB_DIM), jnp.bfloat16)
    logits2 = jax.block_until_ready(
        embedding_classifier_forward(x2, params, act_dtype=act_dtype))
    assert logits2.shape == (300, NUM_CLASSES)
    assert jnp.allclose(logits2, reference_forward_raw(x2, raw), atol=5e-2, rtol=5e-2), \
        "mismatch vs raw reference (ragged batch)"

    print("KERNEL_OK")
</pallas_src>

<mosaic_0001>
module attributes {stable_mosaic.version = 11 : i64} {
  func.func @_mlp_kernel(%arg0: i32, %arg1: memref<16x384xbf16, #tpu.memory_space<vmem>>, %arg2: memref<384x512xbf16, #tpu.memory_space<vmem>>, %arg3: memref<1x512xf32, #tpu.memory_space<vmem>>, %arg4: memref<512x256xbf16, #tpu.memory_space<vmem>>, %arg5: memref<1x256xf32, #tpu.memory_space<vmem>>, %arg6: memref<256x128xbf16, #tpu.memory_space<vmem>>, %arg7: memref<1x128xf32, #tpu.memory_space<vmem>>, %arg8: memref<16x128xbf16, #tpu.memory_space<vmem>>) attributes {dimension_semantics = [#tpu.dimension_semantics<parallel>], iteration_bounds = array<i64: 1>, scalar_prefetch = 0 : i64, scratch_operands = 0 : i64, tpu.core_type = #tpu.core_type<tc>, window_params = [{transform_indices = @transform_0, window_bounds = array<i64: 16, 384>}, {pipeline_mode = #tpu.pipeline_mode<synchronous>, transform_indices = @transform_1, window_bounds = array<i64: 384, 512>}, {pipeline_mode = #tpu.pipeline_mode<synchronous>, transform_indices = @transform_2, window_bounds = array<i64: 1, 512>}, {pipeline_mode = #tpu.pipeline_mode<synchronous>, transform_indices = @transform_3, window_bounds = array<i64: 512, 256>}, {pipeline_mode = #tpu.pipeline_mode<synchronous>, transform_indices = @transform_4, window_bounds = array<i64: 1, 256>}, {pipeline_mode = #tpu.pipeline_mode<synchronous>, transform_indices = @transform_5, window_bounds = array<i64: 256, 128>}, {pipeline_mode = #tpu.pipeline_mode<synchronous>, transform_indices = @transform_6, window_bounds = array<i64: 1, 128>}, {transform_indices = @transform_7, window_bounds = array<i64: 16, 128>}]} {
    %c0 = arith.constant 0 : index
    %c0_0 = arith.constant 0 : index
    %0 = vector.load %arg1[%c0, %c0_0] : memref<16x384xbf16, #tpu.memory_space<vmem>>, vector<16x384xbf16>
    %c0_1 = arith.constant 0 : index
    %c0_2 = arith.constant 0 : index
    %1 = vector.load %arg2[%c0_1, %c0_2] : memref<384x512xbf16, #tpu.memory_space<vmem>>, vector<384x512xbf16>
    %cst = arith.constant dense<0.000000e+00> : vector<16x512xf32>
    %2 = tpu.matmul %0, %1, %cst {dimension_numbers = #tpu.dot_dimension_numbers<[1], [0], [0], [1], [0, 0, 1, 1], [], []>} : vector<16x384xbf16>, vector<384x512xbf16>, vector<16x512xf32> -> vector<16x512xf32>
    %c0_3 = arith.constant 0 : index
    %c0_4 = arith.constant 0 : index
    %3 = vector.load %arg3[%c0_3, %c0_4] : memref<1x512xf32, #tpu.memory_space<vmem>>, vector<1x512xf32>
    %4 = vector.broadcast %3 : vector<1x512xf32> to vector<16x512xf32>
    %5 = arith.addf %2, %4 : vector<16x512xf32>
    %6 = arith.truncf %5 : vector<16x512xf32> to vector<16x512xbf16>
    %cst_5 = arith.constant 0.000000e+00 : bf16
    %7 = vector.broadcast %cst_5 : bf16 to vector<16x512xbf16>
    %8 = arith.maximumf %6, %7 : vector<16x512xbf16>
    %c0_6 = arith.constant 0 : index
    %c0_7 = arith.constant 0 : index
    %9 = vector.load %arg4[%c0_6, %c0_7] : memref<512x256xbf16, #tpu.memory_space<vmem>>, vector<512x256xbf16>
    %cst_8 = arith.constant dense<0.000000e+00> : vector<16x256xf32>
    %10 = tpu.matmul %8, %9, %cst_8 {dimension_numbers = #tpu.dot_dimension_numbers<[1], [0], [0], [1], [0, 0, 1, 1], [], []>} : vector<16x512xbf16>, vector<512x256xbf16>, vector<16x256xf32> -> vector<16x256xf32>
    %c0_9 = arith.constant 0 : index
    %c0_10 = arith.constant 0 : index
    %11 = vector.load %arg5[%c0_9, %c0_10] : memref<1x256xf32, #tpu.memory_space<vmem>>, vector<1x256xf32>
    %12 = vector.broadcast %11 : vector<1x256xf32> to vector<16x256xf32>
    %13 = arith.addf %10, %12 : vector<16x256xf32>
    %14 = arith.truncf %13 : vector<16x256xf32> to vector<16x256xbf16>
    %cst_11 = arith.constant 0.000000e+00 : bf16
    %15 = vector.broadcast %cst_11 : bf16 to vector<16x256xbf16>
    %16 = arith.maximumf %14, %15 : vector<16x256xbf16>
    %c0_12 = arith.constant 0 : index
    %c0_13 = arith.constant 0 : index
    %17 = vector.load %arg6[%c0_12, %c0_13] : memref<256x128xbf16, #tpu.memory_space<vmem>>, vector<256x128xbf16>
    %cst_14 = arith.constant dense<0.000000e+00> : vector<16x128xf32>
    %18 = tpu.matmul %16, %17, %cst_14 {dimension_numbers = #tpu.dot_dimension_numbers<[1], [0], [0], [1], [0, 0, 1, 1], [], []>} : vector<16x256xbf16>, vector<256x128xbf16>, vector<16x128xf32> -> vector<16x128xf32>
    %c0_15 = arith.constant 0 : index
    %c0_16 = arith.constant 0 : index
    %19 = vector.load %arg7[%c0_15, %c0_16] : memref<1x128xf32, #tpu.memory_space<vmem>>, vector<1x128xf32>
    %20 = vector.broadcast %19 : vector<1x128xf32> to vector<16x128xf32>
    %21 = arith.addf %18, %20 : vector<16x128xf32>
    %22 = arith.truncf %21 : vector<16x128xf32> to vector<16x128xbf16>
    %c0_17 = arith.constant 0 : index
    %c0_18 = arith.constant 0 : index
    %23 = vector.load %arg8[%c0_17, %c0_18] : memref<16x128xbf16, #tpu.memory_space<vmem>>, vector<16x128xbf16>
    tpu.vector_store %arg8[%c0_17, %c0_18], %22 {strides = array<i32>} : memref<16x128xbf16, #tpu.memory_space<vmem>>, vector<16x128xbf16>,
    return
  }
  func.func @transform_0(%arg0: i32) -> (i32, i32) {
    %c0_i32 = arith.constant 0 : i32
    %c0_i32_0 = arith.constant 0 : i32
    return %arg0, %c0_i32 : i32, i32
  }
  func.func @transform_1(%arg0: i32) -> (i32, i32) {
    %c0_i32 = arith.constant 0 : i32
    %c0_i32_0 = arith.constant 0 : i32
    %c0_i32_1 = arith.constant 0 : i32
    return %c0_i32, %c0_i32_0 : i32, i32
  }
  func.func @transform_2(%arg0: i32) -> (i32, i32) {
    %c0_i32 = arith.constant 0 : i32
    %c0_i32_0 = arith.constant 0 : i32
    %c0_i32_1 = arith.constant 0 : i32
    return %c0_i32, %c0_i32_0 : i32, i32
  }
  func.func @transform_3(%arg0: i32) -> (i32, i32) {
    %c0_i32 = arith.constant 0 : i32
    %c0_i32_0 = arith.constant 0 : i32
    %c0_i32_1 = arith.constant 0 : i32
    return %c0_i32, %c0_i32_0 : i32, i32
  }
  func.func @transform_4(%arg0: i32) -> (i32, i32) {
    %c0_i32 = arith.constant 0 : i32
    %c0_i32_0 = arith.constant 0 : i32
    %c0_i32_1 = arith.constant 0 : i32
    return %c0_i32, %c0_i32_0 : i32, i32
  }
  func.func @transform_5(%arg0: i32) -> (i32, i32) {
    %c0_i32 = arith.constant 0 : i32
    %c0_i32_0 = arith.constant 0 : i32
    %c0_i32_1 = arith.constant 0 : i32
    return %c0_i32, %c0_i32_0 : i32, i32
  }
  func.func @transform_6(%arg0: i32) -> (i32, i32) {
    %c0_i32 = arith.constant 0 : i32
    %c0_i32_0 = arith.constant 0 : i32
    %c0_i32_1 = arith.constant 0 : i32
    return %c0_i32, %c0_i32_0 : i32, i32
  }
  func.func @transform_7(%arg0: i32) -> (i32, i32) {
    %c0_i32 = arith.constant 0 : i32
    %c0_i32_0 = arith.constant 0 : i32
    return %arg0, %c0_i32 : i32, i32
  }
}

</mosaic_0001>

<llo_original>
// kernel: embedding_classifier_forward.1
$region0: #{embedding_classifier_forward.1}
  #allocation0 [shape = 'u32[]', space=smem, size = 0x4, offset = 0x4, fixed_abs, tag = 'smem constant byte address 0x4 - core index']
  #allocation1 [shape = 'u32[144,128]{1,0:T(1,128)}', space=vmem, size = 0x12000, scoped, tag = 'internal scratch']
  %s0 = inlined_call_operand.hbm [shape: bf16[16,384], index: 0, kind: input, shape index: {}]
  %s1 = inlined_call_operand.hbm [shape: bf16[384,512], index: 1, kind: input, shape index: {}]
  %s2 = inlined_call_operand.vmem [shape: f32[1,512], index: 2, kind: input, shape index: {}]
  %s3 = inlined_call_operand.hbm [shape: bf16[512,256], index: 3, kind: input, shape index: {}]
  %s4 = inlined_call_operand.vmem [shape: f32[1,256], index: 4, kind: input, shape index: {}]
  %s5 = inlined_call_operand.hbm [shape: bf16[256,128], index: 5, kind: input, shape index: {}]
  %s6 = inlined_call_operand.vmem [shape: f32[1,128], index: 6, kind: input, shape index: {}]
  %s7 = inlined_call_operand.vmem [shape: bf16[16,128], index: 7, kind: output, shape index: {}]
  %s8 = sld [smem:[#allocation0]]
  $region54: #{embedding_classifier_forward.1} parent=0
    _
  %s10 = ssub.s32 1, %s8
  %s11 = scalar_select 0, %s10, %s8
  $region1: #{embedding_classifier_forward.1} parent=0
    #allocation2 [shape = 'u8[12288]{0}', space=vmem, size = 0x3000, scoped, tag = 'input window, operand 0, single buffered']
    #allocation3 [shape = 's32[1]{0}', space=sflag, size = 0x4, scoped, tag = 'scoped memory for embedding_classifier_forward.1']
    #allocation4 [shape = 'u8[393216]{0}', space=vmem, size = 0x60000, scoped, tag = 'input window, operand 1, single buffered']
    #allocation5 [shape = 's32[1]{0}', space=sflag, size = 0x4, scoped, tag = 'scoped memory for embedding_classifier_forward.1']
    #allocation6 [shape = 'u8[262144]{0}', space=vmem, size = 0x40000, scoped, tag = 'input window, operand 3, single buffered']
    #allocation7 [shape = 'u8[65536]{0}', space=vmem, size = 0x10000, scoped, tag = 'input window, operand 5, single buffered']
    #allocation8 [shape = 's32[1]{0}', space=sflag, size = 0x4, scoped, tag = 'scoped memory for embedding_classifier_forward.1']
    %12 = vsyncpa [#allocation3], 0
    %13 = vsyncpa [#allocation5], 0
    %14 = vsyncpa [#allocation8], 0
    // Predicated region
    $region2: #{embedding_classifier_forward.1} parent=1 // pred_check
      _
    $region3: #{embedding_classifier_forward.1} parent=1 // pred_check_branch
      %16 = sbr.rel (0) target = $region5
    $region4: #{embedding_classifier_forward.1} parent=1 // pred_region
      %s18 = ssub.s32 384, 384
      %19 = vsyncadd [#allocation3], %s18
      %s20 = sshll.u32 [#allocation2], 4
      %s21 = int_to_ptr.vmem [resolvable:$true] %s20
      %26 = dma.hbm_to_vmem [thread:$0]  %s0, 384, %s21, [#allocation3], 192, 192, 12
    $region5: #{embedding_classifier_forward.1} parent=1 // pred_fallthru
      _
    // Predicated region
    $region6: #{embedding_classifier_forward.1} parent=1 // pred_check
      _
    $region7: #{embedding_classifier_forward.1} parent=1 // pred_check_branch
      %28 = sbr.rel (0) target = $region9
    $region8: #{embedding_classifier_forward.1} parent=1 // pred_region
      %s30 = ssub.s32 12288, 12288
      %31 = vsyncadd [#allocation5], %s30
      %s32 = sshll.u32 [#allocation4], 4
      %s33 = int_to_ptr.vmem [resolvable:$true] %s32
      %38 = dma.hbm_to_vmem [thread:$0]  %s1, 12288, %s33, [#allocation5], 256, 256, 16
    $region9: #{embedding_classifier_forward.1} parent=1 // pred_fallthru
      _
    // Predicated region
    $region10: #{embedding_classifier_forward.1} parent=1 // pred_check
      _
    $region11: #{embedding_classifier_forward.1} parent=1 // pred_check_branch
      %40 = sbr.rel (0) target = $region13
    $region12: #{embedding_classifier_forward.1} parent=1 // pred_region
      _
    $region13: #{embedding_classifier_forward.1} parent=1 // pred_fallthru
      _
    // Predicated region
    $region14: #{embedding_classifier_forward.1} parent=1 // pred_check
      _
    $region15: #{embedding_classifier_forward.1} parent=1 // pred_check_branch
      %42 = sbr.rel (0) target = $region17
    $region16: #{embedding_classifier_forward.1} parent=1 // pred_region
      %s44 = ssub.s32 8192, 8192
      %45 = vsyncadd [#allocation5], %s44
      %s46 = sshll.u32 [#allocation6], 4
      %s47 = int_to_ptr.vmem [resolvable:$true] %s46
      %52 = dma.hbm_to_vmem [thread:$0]  %s3, 8192, %s47, [#allocation5], 128, 128, 8
    $region17: #{embedding_classifier_forward.1} parent=1 // pred_fallthru
      _
    // Predicated region
    $region18: #{embedding_classifier_forward.1} parent=1 // pred_check
      _
    $region19: #{embedding_classifier_forward.1} parent=1 // pred_check_branch
      %54 = sbr.rel (0) target = $region21
    $region20: #{embedding_classifier_forward.1} parent=1 // pred_region
      _
    $region21: #{embedding_classifier_forward.1} parent=1 // pred_fallthru
      _
    // Predicated region
    $region22: #{embedding_classifier_forward.1} parent=1 // pred_check
      _
    $region23: #{embedding_classifier_forward.1} parent=1 // pred_check_branch
      %56 = sbr.rel (0) target = $region25
    $region24: #{embedding_classifier_forward.1} parent=1 // pred_region
      %s58 = ssub.s32 2048, 2048
      %59 = vsyncadd [#allocation8], %s58
      %s60 = sshll.u32 [#allocation7], 4
      %s61 = int_to_ptr.vmem [resolvable:$true] %s60
      %66 = dma.hbm_to_vmem [thread:$0]  %s5, 2048, %s61, [#allocation8], 64, 64, 4
    $region25: #{embedding_classifier_forward.1} parent=1 // pred_fallthru
      _
    // Predicated region
    $region26: #{embedding_classifier_forward.1} parent=1 // pred_check
      _
    $region27: #{embedding_classifier_forward.1} parent=1 // pred_check_branch
      %68 = sbr.rel (0) target = $region29
    $region28: #{embedding_classifier_forward.1} parent=1 // pred_region
      _
    $region29: #{embedding_classifier_forward.1} parent=1 // pred_fallthru
      _
    // Predicated region
    $region30: #{embedding_classifier_forward.1} parent=1 // pred_check
      _
    $region31: #{embedding_classifier_forward.1} parent=1 // pred_check_branch
      %70 = sbr.rel (0) target = $region33
    $region32: #{embedding_classifier_forward.1} parent=1 // pred_region
      %71 = dma.done [#allocation3], 384
    $region33: #{embedding_classifier_forward.1} parent=1 // pred_fallthru
      _
    // Predicated region
    $region34: #{embedding_classifier_forward.1} parent=1 // pred_check
      _
    $region35: #{embedding_classifier_forward.1} parent=1 // pred_check_branch
      %73 = sbr.rel (0) target = $region37
    $region36: #{embedding_classifier_forward.1} parent=1 // pred_region
      %74 = dma.done [#allocation5], 12288
    $region37: #{embedding_classifier_forward.1} parent=1 // pred_fallthru
      _
    // Predicated region
    $region38: #{embedding_classifier_forward.1} parent=1 // pred_check
      _
    $region39: #{embedding_classifier_forward.1} parent=1 // pred_check_branch
      %76 = sbr.rel (0) target = $region41
    $region40: #{embedding_classifier_forward.1} parent=1 // pred_region
      %77 = dma.done [#allocation5], 8192
    $region41: #{embedding_classifier_forward.1} parent=1 // pred_fallthru
      _
    // Predicated region
    $region42: #{embedding_classifier_forward.1} parent=1 // pred_check
      _
    $region43: #{embedding_classifier_forward.1} parent=1 // pred_check_branch
      %79 = sbr.rel (0) target = $region45
    $region44: #{embedding_classifier_forward.1} parent=1 // pred_region
      %80 = dma.done [#allocation8], 2048
    $region45: #{embedding_classifier_forward.1} parent=1 // pred_fallthru
      _
    %v82 = vld [vmem:[#allocation2] sm:$0xff]
    %v83 = vld [vmem:[#allocation2 + $0x8] sm:$0xf]
    %v84 = vld [vmem:[#allocation2 + $0xc] sm:$0xff]
    %v85 = vld [vmem:[#allocation2 + $0x14] sm:$0xf]
    %v86 = vld [vmem:[#allocation4] sm:$0xff]
    %v87 = vld [vmem:[#allocation4 + $0x8] sm:$0xff]
    %v88 = vld [vmem:[#allocation4 + $0x10] sm:$0xff]
    %v89 = vld [vmem:[#allocation4 + $0x18] sm:$0xff]
    %v90 = vld [vmem:[#allocation4 + $0x20] sm:$0xff]
    %v91 = vld [vmem:[#allocation4 + $0x28] sm:$0xff]
    %v92 = vld [vmem:[#allocation4 + $0x30] sm:$0xff]
    %v93 = vld [vmem:[#allocation4 + $0x38] sm:$0xff]
    %v94 = vld [vmem:[#allocation4 + $0x40] sm:$0xff]
    %v95 = vld [vmem:[#allocation4 + $0x48] sm:$0xff]
    %v96 = vld [vmem:[#allocation4 + $0x50] sm:$0xff]
    %v97 = vld [vmem:[#allocation4 + $0x58] sm:$0xff]
    %v98 = vld [vmem:[#allocation4 + $0x60] sm:$0xff]
    %v99 = vld [vmem:[#allocation4 + $0x68] sm:$0xff]
    %v100 = vld [vmem:[#allocation4 + $0x70] sm:$0xff]
    %v101 = vld [vmem:[#allocation4 + $0x78] sm:$0xff]
    %v102 = vld [vmem:[#allocation4 + $0x80] sm:$0xff]
    %v103 = vld [vmem:[#allocation4 + $0x88] sm:$0xff]
    %v104 = vld [vmem:[#allocation4 + $0x90] sm:$0xff]
    %v105 = vld [vmem:[#allocation4 + $0x98] sm:$0xff]
    %v106 = vld [vmem:[#allocation4 + $0xa0] sm:$0xff]
    %v107 = vld [vmem:[#allocation4 + $0xa8] sm:$0xff]
    %v108 = vld [vmem:[#allocation4 + $0xb0] sm:$0xff]
    %v109 = vld [vmem:[#allocation4 + $0xb8] sm:$0xff]
    %v110 = vld [vmem:[#allocation4 + $0xc0] sm:$0xff]
    %v111 = vld [vmem:[#allocation4 + $0xc8] sm:$0xff]
    %v112 = vld [vmem:[#allocation4 + $0xd0] sm:$0xff]
    %v113 = vld [vmem:[#allocation4 + $0xd8] sm:$0xff]
    %v114 = vld [vmem:[#allocation4 + $0xe0] sm:$0xff]
    %v115 = vld [vmem:[#allocation4 + $0xe8] sm:$0xff]
    %v116 = vld [vmem:[#allocation4 + $0xf0] sm:$0xff]
    %v117 = vld [vmem:[#allocation4 + $0xf8] sm:$0xff]
    %v118 = vld [vmem:[#allocation4 + $0x100] sm:$0xff]
    %v119 = vld [vmem:[#allocation4 + $0x108] sm:$0xff]
    %v120 = vld [vmem:[#allocation4 + $0x110] sm:$0xff]
    %v121 = vld [vmem:[#allocation4 + $0x118] sm:$0xff]
    %v122 = vld [vmem:[#allocation4 + $0x120] sm:$0xff]
    %v123 = vld [vmem:[#allocation4 + $0x128] sm:$0xff]
    %v124 = vld [vmem:[#allocation4 + $0x130] sm:$0xff]
    %v125 = vld [vmem:[#allocation4 + $0x138] sm:$0xff]
    %v126 = vld [vmem:[#allocation4 + $0x140] sm:$0xff]
    %v127 = vld [vmem:[#allocation4 + $0x148] sm:$0xff]
    %v128 = vld [vmem:[#allocation4 + $0x150] sm:$0xff]
    %v129 = vld [vmem:[#allocation4 + $0x158] sm:$0xff]
    %v130 = vld [vmem:[#allocation4 + $0x160] sm:$0xff]
    %v131 = vld [vmem:[#allocation4 + $0x168] sm:$0xff]
    %v132 = vld [vmem:[#allocation4 + $0x170] sm:$0xff]
    %v133 = vld [vmem:[#allocation4 + $0x178] sm:$0xff]
    %v134 = vld [vmem:[#allocation4 + $0x180] sm:$0xff]
    %v135 = vld [vmem:[#allocation4 + $0x188] sm:$0xff]
    %v136 = vld [vmem:[#allocation4 + $0x190] sm:$0xff]
    %v137 = vld [vmem:[#allocation4 + $0x198] sm:$0xff]
    %v138 = vld [vmem:[#allocation4 + $0x1a0] sm:$0xff]
    %v139 = vld [vmem:[#allocation4 + $0x1a8] sm:$0xff]
    %v140 = vld [vmem:[#allocation4 + $0x1b0] sm:$0xff]
    %v141 = vld [vmem:[#allocation4 + $0x1b8] sm:$0xff]
    %v142 = vld [vmem:[#allocation4 + $0x1c0] sm:$0xff]
    %v143 = vld [vmem:[#allocation4 + $0x1c8] sm:$0xff]
    %v144 = vld [vmem:[#allocation4 + $0x1d0] sm:$0xff]
    %v145 = vld [vmem:[#allocation4 + $0x1d8] sm:$0xff]
    %v146 = vld [vmem:[#allocation4 + $0x1e0] sm:$0xff]
    %v147 = vld [vmem:[#allocation4 + $0x1e8] sm:$0xff]
    %v148 = vld [vmem:[#allocation4 + $0x1f0] sm:$0xff]
    %v149 = vld [vmem:[#allocation4 + $0x1f8] sm:$0xff]
    %v150 = vld [vmem:[#allocation4 + $0x200] sm:$0xff]
    %v151 = vld [vmem:[#allocation4 + $0x208] sm:$0xff]
    %v152 = vld [vmem:[#allocation4 + $0x210] sm:$0xff]
    %v153 = vld [vmem:[#allocation4 + $0x218] sm:$0xff]
    %v154 = vld [vmem:[#allocation4 + $0x220] sm:$0xff]
    %v155 = vld [vmem:[#allocation4 + $0x228] sm:$0xff]
    %v156 = vld [vmem:[#allocation4 + $0x230] sm:$0xff]
    %v157 = vld [vmem:[#allocation4 + $0x238] sm:$0xff]
    %v158 = vld [vmem:[#allocation4 + $0x240] sm:$0xff]
    %v159 = vld [vmem:[#allocation4 + $0x248] sm:$0xff]
    %v160 = vld [vmem:[#allocation4 + $0x250] sm:$0xff]
    %v161 = vld [vmem:[#allocation4 + $0x258] sm:$0xff]
    %v162 = vld [vmem:[#allocation4 + $0x260] sm:$0xff]
    %v163 = vld [vmem:[#allocation4 + $0x268] sm:$0xff]
    %v164 = vld [vmem:[#allocation4 + $0x270] sm:$0xff]
    %v165 = vld [vmem:[#allocation4 + $0x278] sm:$0xff]
    %v166 = vld [vmem:[#allocation4 + $0x280] sm:$0xff]
    %v167 = vld [vmem:[#allocation4 + $0x288] sm:$0xff]
    %v168 = vld [vmem:[#allocation4 + $0x290] sm:$0xff]
    %v169 = vld [vmem:[#allocation4 + $0x298] sm:$0xff]
    %v170 = vld [vmem:[#allocation4 + $0x2a0] sm:$0xff]
    %v171 = vld [vmem:[#allocation4 + $0x2a8] sm:$0xff]
    %v172 = vld [vmem:[#allocation4 + $0x2b0] sm:$0xff]
    %v173 = vld [vmem:[#allocation4 + $0x2b8] sm:$0xff]
    %v174 = vld [vmem:[#allocation4 + $0x2c0] sm:$0xff]
    %v175 = vld [vmem:[#allocation4 + $0x2c8] sm:$0xff]
    %v176 = vld [vmem:[#allocation4 + $0x2d0] sm:$0xff]
    %v177 = vld [vmem:[#allocation4 + $0x2d8] sm:$0xff]
    %v178 = vld [vmem:[#allocation4 + $0x2e0] sm:$0xff]
    %v179 = vld [vmem:[#allocation4 + $0x2e8] sm:$0xff]
    %v180 = vld [vmem:[#allocation4 + $0x2f0] sm:$0xff]
    %v181 = vld [vmem:[#allocation4 + $0x2f8] sm:$0xff]
    %v182 = vld [vmem:[%s2] sm:$0xf]
    %v184 = vlaneseq
    %v185 = vshrl.u32 %v184, 7
    %v186 = vsub.s32 0, %v185
    %v187 = vrot.slane %v182, %v186
    %v188 = vlaneseq
    %v189 = vshrl.u32 %v188, 7
    %v190 = vsub.s32 1, %v189
    %v191 = vrot.slane %v182, %v190
    %v192 = vlaneseq
    %v193 = vshrl.u32 %v192, 7
    %v194 = vsub.s32 2, %v193
    %v195 = vrot.slane %v182, %v194
    %v196 = vlaneseq
    %v197 = vshrl.u32 %v196, 7
    %v198 = vsub.s32 3, %v197
    %v199 = vrot.slane %v182, %v198
    %v208 = vunpack.c.l.b16 %v82
    %v209 = vunpack.c.h.b16 %v82
    %v210 = vunpack.c.l.b16 %v83
    %v211 = vunpack.c.l.b16 %v84
    %v212 = vunpack.c.h.b16 %v84
    %v213 = vunpack.c.l.b16 %v85
    %v214 = vpack.c.b16 %v211, %v208
    %v215 = vpack.c.b16 %v212, %v209
    %v216 = vpack.c.b16 %v213, %v210
    %v316 = vunpack.c.l.b16 %v86
    %v317 = vunpack.c.h.b16 %v86
    %v318 = vunpack.c.l.b16 %v87
    %v319 = vunpack.c.h.b16 %v87
    %v320 = vunpack.c.l.b16 %v88
    %v321 = vunpack.c.h.b16 %v88
    %v322 = vunpack.c.l.b16 %v89
    %v323 = vunpack.c.h.b16 %v89
    %v324 = vunpack.c.l.b16 %v90
    %v325 = vunpack.c.h.b16 %v90
    %v326 = vunpack.c.l.b16 %v91
    %v327 = vunpack.c.h.b16 %v91
    %v328 = vunpack.c.l.b16 %v92
    %v329 = vunpack.c.h.b16 %v92
    %v330 = vunpack.c.l.b16 %v93
    %v331 = vunpack.c.h.b16 %v93
    %v332 = vunpack.c.l.b16 %v94
    %v333 = vunpack.c.h.b16 %v94
    %v334 = vunpack.c.l.b16 %v95
    %v335 = vunpack.c.h.b16 %v95
    %v336 = vunpack.c.l.b16 %v96
    %v337 = vunpack.c.h.b16 %v96
    %v338 = vunpack.c.l.b16 %v97
    %v339 = vunpack.c.h.b16 %v97
    %v340 = vunpack.c.l.b16 %v98
    %v341 = vunpack.c.h.b16 %v98
    %v342 = vunpack.c.l.b16 %v99
    %v343 = vunpack.c.h.b16 %v99
    %v344 = vunpack.c.l.b16 %v100
    %v345 = vunpack.c.h.b16 %v100
    %v346 = vunpack.c.l.b16 %v101
    %v347 = vunpack.c.h.b16 %v101
    %v348 = vunpack.c.l.b16 %v102
    %v349 = vunpack.c.h.b16 %v102
    %v350 = vunpack.c.l.b16 %v103
    %v351 = vunpack.c.h.b16 %v103
    %v352 = vunpack.c.l.b16 %v104
    %v353 = vunpack.c.h.b16 %v104
    %v354 = vunpack.c.l.b16 %v105
    %v355 = vunpack.c.h.b16 %v105
    %v356 = vunpack.c.l.b16 %v106
    %v357 = vunpack.c.h.b16 %v106
    %v358 = vunpack.c.l.b16 %v107
    %v359 = vunpack.c.h.b16 %v107
    %v360 = vunpack.c.l.b16 %v108
    %v361 = vunpack.c.h.b16 %v108
    %v362 = vunpack.c.l.b16 %v109
    %v363 = vunpack.c.h.b16 %v109
    %v364 = vunpack.c.l.b16 %v110
    %v365 = vunpack.c.h.b16 %v110
    %v366 = vunpack.c.l.b16 %v111
    %v367 = vunpack.c.h.b16 %v111
    %v368 = vunpack.c.l.b16 %v112
    %v369 = vunpack.c.h.b16 %v112
    %v370 = vunpack.c.l.b16 %v113
    %v371 = vunpack.c.h.b16 %v113
    %v372 = vunpack.c.l.b16 %v114
    %v373 = vunpack.c.h.b16 %v114
    %v374 = vunpack.c.l.b16 %v115
    %v375 = vunpack.c.h.b16 %v115
    %v376 = vunpack.c.l.b16 %v116
    %v377 = vunpack.c.h.b16 %v116
    %v378 = vunpack.c.l.b16 %v117
    %v379 = vunpack.c.h.b16 %v117
    %v380 = vunpack.c.l.b16 %v118
    %v381 = vunpack.c.h.b16 %v118
    %v382 = vunpack.c.l.b16 %v119
    %v383 = vunpack.c.h.b16 %v119
    %v384 = vunpack.c.l.b16 %v120
    %v385 = vunpack.c.h.b16 %v120
    %v386 = vunpack.c.l.b16 %v121
    %v387 = vunpack.c.h.b16 %v121
    %v388 = vunpack.c.l.b16 %v122
    %v389 = vunpack.c.h.b16 %v122
    %v390 = vunpack.c.l.b16 %v123
    %v391 = vunpack.c.h.b16 %v123
    %v392 = vunpack.c.l.b16 %v124
    %v393 = vunpack.c.h.b16 %v124
    %v394 = vunpack.c.l.b16 %v125
    %v395 = vunpack.c.h.b16 %v125
    %v396 = vunpack.c.l.b16 %v126
    %v397 = vunpack.c.h.b16 %v126
    %v398 = vunpack.c.l.b16 %v127
    %v399 = vunpack.c.h.b16 %v127
    %v400 = vunpack.c.l.b16 %v128
    %v401 = vunpack.c.h.b16 %v128
    %v402 = vunpack.c.l.b16 %v129
    %v403 = vunpack.c.h.b16 %v129
    %v404 = vunpack.c.l.b16 %v130
    %v405 = vunpack.c.h.b16 %v130
    %v406 = vunpack.c.l.b16 %v131
    %v407 = vunpack.c.h.b16 %v131
    %v408 = vunpack.c.l.b16 %v132
    %v409 = vunpack.c.h.b16 %v132
    %v410 = vunpack.c.l.b16 %v133
    %v411 = vunpack.c.h.b16 %v133
    %v412 = vunpack.c.l.b16 %v134
    %v413 = vunpack.c.h.b16 %v134
    %v414 = vunpack.c.l.b16 %v135
    %v415 = vunpack.c.h.b16 %v135
    %v416 = vunpack.c.l.b16 %v136
    %v417 = vunpack.c.h.b16 %v136
    %v418 = vunpack.c.l.b16 %v137
    %v419 = vunpack.c.h.b16 %v137
    %v420 = vunpack.c.l.b16 %v138
    %v421 = vunpack.c.h.b16 %v138
    %v422 = vunpack.c.l.b16 %v139
    %v423 = vunpack.c.h.b16 %v139
    %v424 = vunpack.c.l.b16 %v140
    %v425 = vunpack.c.h.b16 %v140
    %v426 = vunpack.c.l.b16 %v141
    %v427 = vunpack.c.h.b16 %v141
    %v428 = vunpack.c.l.b16 %v142
    %v429 = vunpack.c.h.b16 %v142
    %v430 = vunpack.c.l.b16 %v143
    %v431 = vunpack.c.h.b16 %v143
    %v432 = vunpack.c.l.b16 %v144
    %v433 = vunpack.c.h.b16 %v144
    %v434 = vunpack.c.l.b16 %v145
    %v435 = vunpack.c.h.b16 %v145
    %v436 = vunpack.c.l.b16 %v146
    %v437 = vunpack.c.h.b16 %v146
    %v438 = vunpack.c.l.b16 %v147
    %v439 = vunpack.c.h.b16 %v147
    %v440 = vunpack.c.l.b16 %v148
    %v441 = vunpack.c.h.b16 %v148
    %v442 = vunpack.c.l.b16 %v149
    %v443 = vunpack.c.h.b16 %v149
    %v444 = vunpack.c.l.b16 %v150
    %v445 = vunpack.c.h.b16 %v150
    %v446 = vunpack.c.l.b16 %v151
    %v447 = vunpack.c.h.b16 %v151
    %v448 = vunpack.c.l.b16 %v152
    %v449 = vunpack.c.h.b16 %v152
    %v450 = vunpack.c.l.b16 %v153
    %v451 = vunpack.c.h.b16 %v153
    %v452 = vunpack.c.l.b16 %v154
    %v453 = vunpack.c.h.b16 %v154
    %v454 = vunpack.c.l.b16 %v155
    %v455 = vunpack.c.h.b16 %v155
    %v456 = vunpack.c.l.b16 %v156
    %v457 = vunpack.c.h.b16 %v156
    %v458 = vunpack.c.l.b16 %v157
    %v459 = vunpack.c.h.b16 %v157
    %v460 = vunpack.c.l.b16 %v158
    %v461 = vunpack.c.h.b16 %v158
    %v462 = vunpack.c.l.b16 %v159
    %v463 = vunpack.c.h.b16 %v159
    %v464 = vunpack.c.l.b16 %v160
    %v465 = vunpack.c.h.b16 %v160
    %v466 = vunpack.c.l.b16 %v161
    %v467 = vunpack.c.h.b16 %v161
    %v468 = vunpack.c.l.b16 %v162
    %v469 = vunpack.c.h.b16 %v162
    %v470 = vunpack.c.l.b16 %v163
    %v471 = vunpack.c.h.b16 %v163
    %v472 = vunpack.c.l.b16 %v164
    %v473 = vunpack.c.h.b16 %v164
    %v474 = vunpack.c.l.b16 %v165
    %v475 = vunpack.c.h.b16 %v165
    %v476 = vunpack.c.l.b16 %v166
    %v477 = vunpack.c.h.b16 %v166
    %v478 = vunpack.c.l.b16 %v167
    %v479 = vunpack.c.h.b16 %v167
    %v480 = vunpack.c.l.b16 %v168
    %v481 = vunpack.c.h.b16 %v168
    %v482 = vunpack.c.l.b16 %v169
    %v483 = vunpack.c.h.b16 %v169
    %v484 = vunpack.c.l.b16 %v170
    %v485 = vunpack.c.h.b16 %v170
    %v486 = vunpack.c.l.b16 %v171
    %v487 = vunpack.c.h.b16 %v171
    %v488 = vunpack.c.l.b16 %v172
    %v489 = vunpack.c.h.b16 %v172
    %v490 = vunpack.c.l.b16 %v173
    %v491 = vunpack.c.h.b16 %v173
    %v492 = vunpack.c.l.b16 %v174
    %v493 = vunpack.c.h.b16 %v174
    %v494 = vunpack.c.l.b16 %v175
    %v495 = vunpack.c.h.b16 %v175
    %v496 = vunpack.c.l.b16 %v176
    %v497 = vunpack.c.h.b16 %v176
    %v498 = vunpack.c.l.b16 %v177
    %v499 = vunpack.c.h.b16 %v177
    %v500 = vunpack.c.l.b16 %v178
    %v501 = vunpack.c.h.b16 %v178
    %v502 = vunpack.c.l.b16 %v179
    %v503 = vunpack.c.h.b16 %v179
    %v504 = vunpack.c.l.b16 %v180
    %v505 = vunpack.c.h.b16 %v180
    %v506 = vunpack.c.l.b16 %v181
    %v507 = vunpack.c.h.b16 %v181
    %v508 = vpack.c.b16 %v320, %v316
    %v509 = vpack.c.b16 %v321, %v317
    %v510 = vpack.c.b16 %v322, %v318
    %v511 = vpack.c.b16 %v323, %v319
    %v512 = vpack.c.b16 %v328, %v324
    %v513 = vpack.c.b16 %v329, %v325
    %v514 = vpack.c.b16 %v330, %v326
    %v515 = vpack.c.b16 %v331, %v327
    %v516 = vpack.c.b16 %v336, %v332
    %v517 = vpack.c.b16 %v337, %v333
    %v518 = vpack.c.b16 %v338, %v334
    %v519 = vpack.c.b16 %v339, %v335
    %v520 = vpack.c.b16 %v344, %v340
    %v521 = vpack.c.b16 %v345, %v341
    %v522 = vpack.c.b16 %v346, %v342
    %v523 = vpack.c.b16 %v347, %v343
    %v524 = vpack.c.b16 %v352, %v348
    %v525 = vpack.c.b16 %v353, %v349
    %v526 = vpack.c.b16 %v354, %v350
    %v527 = vpack.c.b16 %v355, %v351
    %v528 = vpack.c.b16 %v360, %v356
    %v529 = vpack.c.b16 %v361, %v357
    %v530 = vpack.c.b16 %v362, %v358
    %v531 = vpack.c.b16 %v363, %v359
    %v532 = vpack.c.b16 %v368, %v364
    %v533 = vpack.c.b16 %v369, %v365
    %v534 = vpack.c.b16 %v370, %v366
    %v535 = vpack.c.b16 %v371, %v367
    %v536 = vpack.c.b16 %v376, %v372
    %v537 = vpack.c.b16 %v377, %v373
    %v538 = vpack.c.b16 %v378, %v374
    %v539 = vpack.c.b16 %v379, %v375
    %v540 = vpack.c.b16 %v384, %v380
    %v541 = vpack.c.b16 %v385, %v381
    %v542 = vpack.c.b16 %v386, %v382
    %v543 = vpack.c.b16 %v387, %v383
    %v544 = vpack.c.b16 %v392, %v388
    %v545 = vpack.c.b16 %v393, %v389
    %v546 = vpack.c.b16 %v394, %v390
    %v547 = vpack.c.b16 %v395, %v391
    %v548 = vpack.c.b16 %v400, %v396
    %v549 = vpack.c.b16 %v401, %v397
    %v550 = vpack.c.b16 %v402, %v398
    %v551 = vpack.c.b16 %v403, %v399
    %v552 = vpack.c.b16 %v408, %v404
    %v553 = vpack.c.b16 %v409, %v405
    %v554 = vpack.c.b16 %v410, %v406
    %v555 = vpack.c.b16 %v411, %v407
    %v556 = vpack.c.b16 %v416, %v412
    %v557 = vpack.c.b16 %v417, %v413
    %v558 = vpack.c.b16 %v418, %v414
    %v559 = vpack.c.b16 %v419, %v415
    %v560 = vpack.c.b16 %v424, %v420
    %v561 = vpack.c.b16 %v425, %v421
    %v562 = vpack.c.b16 %v426, %v422
    %v563 = vpack.c.b16 %v427, %v423
    %v564 = vpack.c.b16 %v432, %v428
    %v565 = vpack.c.b16 %v433, %v429
    %v566 = vpack.c.b16 %v434, %v430
    %v567 = vpack.c.b16 %v435, %v431
    %v568 = vpack.c.b16 %v440, %v436
    %v569 = vpack.c.b16 %v441, %v437
    %v570 = vpack.c.b16 %v442, %v438
    %v571 = vpack.c.b16 %v443, %v439
    %v572 = vpack.c.b16 %v448, %v444
    %v573 = vpack.c.b16 %v449, %v445
    %v574 = vpack.c.b16 %v450, %v446
    %v575 = vpack.c.b16 %v451, %v447
    %v576 = vpack.c.b16 %v456, %v452
    %v577 = vpack.c.b16 %v457, %v453
    %v578 = vpack.c.b16 %v458, %v454
    %v579 = vpack.c.b16 %v459, %v455
    %v580 = vpack.c.b16 %v464, %v460
    %v581 = vpack.c.b16 %v465, %v461
    %v582 = vpack.c.b16 %v466, %v462
    %v583 = vpack.c.b16 %v467, %v463
    %v584 = vpack.c.b16 %v472, %v468
    %v585 = vpack.c.b16 %v473, %v469
    %v586 = vpack.c.b16 %v474, %v470
    %v587 = vpack.c.b16 %v475, %v471
    %v588 = vpack.c.b16 %v480, %v476
    %v589 = vpack.c.b16 %v481, %v477
    %v590 = vpack.c.b16 %v482, %v478
    %v591 = vpack.c.b16 %v483, %v479
    %v592 = vpack.c.b16 %v488, %v484
    %v593 = vpack.c.b16 %v489, %v485
    %v594 = vpack.c.b16 %v490, %v486
    %v595 = vpack.c.b16 %v491, %v487
    %v596 = vpack.c.b16 %v496, %v492
    %v597 = vpack.c.b16 %v497, %v493
    %v598 = vpack.c.b16 %v498, %v494
    %v599 = vpack.c.b16 %v499, %v495
    %v600 = vpack.c.b16 %v504, %v500
    %v601 = vpack.c.b16 %v505, %v501
    %v602 = vpack.c.b16 %v506, %v502
    %v603 = vpack.c.b16 %v507, %v503
    %700 = vmatprep.subr.bf16.mxu0 %v509
    %701 = vmatpush1.bf16.msra.mxu0 %v508
    %702 = vmatprep.subr.bf16.mxu0 %v513
    %703 = vmatpush1.bf16.msra.mxu0 %v512
    %704 = vmatprep.subr.bf16.mxu0 %v517
    %705 = vmatpush1.bf16.msra.mxu0 %v516
    %706 = vmatprep.subr.bf16.mxu0 %v521
    %707 = vmatpush1.bf16.msra.mxu0 %v520
    %708 = vmatprep.subr.bf16.mxu0 %v525
    %709 = vmatpush1.bf16.msra.mxu0 %v524
    %710 = vmatprep.subr.bf16.mxu0 %v529
    %711 = vmatpush1.bf16.msra.mxu0 %v528
    %712 = vmatprep.subr.bf16.mxu0 %v533
    %713 = vmatpush1.bf16.msra.mxu0 %v532
    %714 = vmatprep.subr.bf16.mxu0 %v537
    %715 = vmatpush1.bf16.msra.mxu0 %v536
    %716 = vmatprep.subr.bf16.mxu0 %v541
    %717 = vmatpush1.bf16.msra.mxu0 %v540
    %718 = vmatprep.subr.bf16.mxu0 %v545
    %719 = vmatpush1.bf16.msra.mxu0 %v544
    %720 = vmatprep.subr.bf16.mxu0 %v549
    %721 = vmatpush1.bf16.msra.mxu0 %v548
    %722 = vmatprep.subr.bf16.mxu0 %v553
    %723 = vmatpush1.bf16.msra.mxu0 %v552
    %724 = vmatprep.subr.bf16.mxu0 %v557
    %725 = vmatpush1.bf16.msra.mxu0 %v556
    %726 = vmatprep.subr.bf16.mxu0 %v561
    %727 = vmatpush1.bf16.msra.mxu0 %v560
    %728 = vmatprep.subr.bf16.mxu0 %v565
    %729 = vmatpush1.bf16.msra.mxu0 %v564
    %730 = vmatprep.subr.bf16.mxu0 %v569
    %731 = vmatpush1.bf16.msra.mxu0 %v568
    %732 = vmatprep.mubr.bf16.mxu0 %v215
    %733 = vmatmul.mubr.bf16.gmra.mrb[0].mxu0 %v214
    %v734 = vpop.f32.mrb[0].mxu0
    %v735 = vadd.f32 %v187, %v734
    %v736 = vpop.f32.mrb[0].mxu0
    %v737 = vadd.f32 %v191, %v736
    %v738 = vpop.f32.mrb[0].mxu0
    %v739 = vadd.f32 %v187, %v738
    %v740 = vpop.f32.mrb[0].mxu0
    %v741 = vadd.f32 %v191, %v740
    %742 = vdwg.mxu0
    %743 = vmatprep.subr.bf16.mxu0 %v573
    %744 = vmatpush1.bf16.msra.mxu0 %v572
    %745 = vmatprep.subr.bf16.mxu0 %v577
    %746 = vmatpush1.bf16.msra.mxu0 %v576
    %747 = vmatprep.subr.bf16.mxu0 %v581
    %748 = vmatpush1.bf16.msra.mxu0 %v580
    %749 = vmatprep.subr.bf16.mxu0 %v585
    %750 = vmatpush1.bf16.msra.mxu0 %v584
    %751 = vmatprep.subr.bf16.mxu0 %v589
    %752 = vmatpush1.bf16.msra.mxu0 %v588
    %753 = vmatprep.subr.bf16.mxu0 %v593
    %754 = vmatpush1.bf16.msra.mxu0 %v592
    %755 = vmatprep.subr.bf16.mxu0 %v597
    %756 = vmatpush1.bf16.msra.mxu0 %v596
    %757 = vmatprep.subr.bf16.mxu0 %v601
    %758 = vmatpush1.bf16.msra.mxu0 %v600
    %759 = vmatprep.subr.bf16.mxu0 0
    %760 = vmatpush1.bf16.msra.mxu0 0
    %761 = vmatprep.subr.bf16.mxu0 0
    %762 = vmatpush1.bf16.msra.mxu0 0
    %763 = vmatprep.subr.bf16.mxu0 0
    %764 = vmatpush1.bf16.msra.mxu0 0
    %765 = vmatprep.subr.bf16.mxu0 0
    %766 = vmatpush1.bf16.msra.mxu0 0
    %767 = vmatprep.subr.bf16.mxu0 0
    %768 = vmatpush1.bf16.msra.mxu0 0
    %769 = vmatprep.subr.bf16.mxu0 0
    %770 = vmatpush1.bf16.msra.mxu0 0
    %771 = vmatprep.subr.bf16.mxu0 0
    %772 = vmatpush1.bf16.msra.mxu0 0
    %773 = vmatprep.subr.bf16.mxu0 0
    %774 = vmatpush1.bf16.msra.mxu0 0
    %775 = vmatprep.mubr.bf16.mxu0 0
    %776 = vmatmul.mubr.bf16.gmra.mrb[0].mxu0 %v216
    %v777 = vpop.f32.mrb[0].mxu0
    %v778 = vadd.f32 %v735, %v777
    %v779 = vpop.f32.mrb[0].mxu0
    %v780 = vadd.f32 %v737, %v779
    %v781 = vpop.f32.mrb[0].mxu0
    %v782 = vadd.f32 %v739, %v781
    %v783 = vpop.f32.mrb[0].mxu0
    %v784 = vadd.f32 %v741, %v783
    %785 = vdwg.mxu0
    %786 = vmatprep.subr.bf16.mxu0 %v511
    %787 = vmatpush1.bf16.msra.mxu0 %v510
    %788 = vmatprep.subr.bf16.mxu0 %v515
    %789 = vmatpush1.bf16.msra.mxu0 %v514
    %790 = vmatprep.subr.bf16.mxu0 %v519
    %791 = vmatpush1.bf16.msra.mxu0 %v518
    %792 = vmatprep.subr.bf16.mxu0 %v523
    %793 = vmatpush1.bf16.msra.mxu0 %v522
    %794 = vmatprep.subr.bf16.mxu0 %v527
    %795 = vmatpush1.bf16.msra.mxu0 %v526
    %796 = vmatprep.subr.bf16.mxu0 %v531
    %797 = vmatpush1.bf16.msra.mxu0 %v530
    %798 = vmatprep.subr.bf16.mxu0 %v535
    %799 = vmatpush1.bf16.msra.mxu0 %v534
    %800 = vmatprep.subr.bf16.mxu0 %v539
    %801 = vmatpush1.bf16.msra.mxu0 %v538
    %802 = vmatprep.subr.bf16.mxu0 %v543
    %803 = vmatpush1.bf16.msra.mxu0 %v542
    %804 = vmatprep.subr.bf16.mxu0 %v547
    %805 = vmatpush1.bf16.msra.mxu0 %v546
    %806 = vmatprep.subr.bf16.mxu0 %v551
    %807 = vmatpush1.bf16.msra.mxu0 %v550
    %808 = vmatprep.subr.bf16.mxu0 %v555
    %809 = vmatpush1.bf16.msra.mxu0 %v554
    %810 = vmatprep.subr.bf16.mxu0 %v559
    %811 = vmatpush1.bf16.msra.mxu0 %v558
    %812 = vmatprep.subr.bf16.mxu0 %v563
    %813 = vmatpush1.bf16.msra.mxu0 %v562
    %814 = vmatprep.subr.bf16.mxu0 %v567
    %815 = vmatpush1.bf16.msra.mxu0 %v566
    %816 = vmatprep.subr.bf16.mxu0 %v571
    %817 = vmatpush1.bf16.msra.mxu0 %v570
    %818 = vmatprep.mubr.bf16.mxu0 %v215
    %819 = vmatmul.mubr.bf16.gmra.mrb[0].mxu0 %v214
    %v820 = vpop.f32.mrb[0].mxu0
    %v821 = vadd.f32 %v195, %v820
    %v822 = vpop.f32.mrb[0].mxu0
    %v823 = vadd.f32 %v199, %v822
    %v824 = vpop.f32.mrb[0].mxu0
    %v825 = vadd.f32 %v195, %v824
    %v826 = vpop.f32.mrb[0].mxu0
    %v827 = vadd.f32 %v199, %v826
    %828 = vdwg.mxu0
    %829 = vmatprep.subr.bf16.mxu0 %v575
    %830 = vmatpush1.bf16.msra.mxu0 %v574
    %831 = vmatprep.subr.bf16.mxu0 %v579
    %832 = vmatpush1.bf16.msra.mxu0 %v578
    %833 = vmatprep.subr.bf16.mxu0 %v583
    %834 = vmatpush1.bf16.msra.mxu0 %v582
    %835 = vmatprep.subr.bf16.mxu0 %v587
    %836 = vmatpush1.bf16.msra.mxu0 %v586
    %837 = vmatprep.subr.bf16.mxu0 %v591
    %838 = vmatpush1.bf16.msra.mxu0 %v590
    %839 = vmatprep.subr.bf16.mxu0 %v595
    %840 = vmatpush1.bf16.msra.mxu0 %v594
    %841 = vmatprep.subr.bf16.mxu0 %v599
    %842 = vmatpush1.bf16.msra.mxu0 %v598
    %843 = vmatprep.subr.bf16.mxu0 %v603
    %844 = vmatpush1.bf16.msra.mxu0 %v602
    %845 = vmatprep.subr.bf16.mxu0 0
    %846 = vmatpush1.bf16.msra.mxu0 0
    %847 = vmatprep.subr.bf16.mxu0 0
    %848 = vmatpush1.bf16.msra.mxu0 0
    %849 = vmatprep.subr.bf16.mxu0 0
    %850 = vmatpush1.bf16.msra.mxu0 0
    %851 = vmatprep.subr.bf16.mxu0 0
    %852 = vmatpush1.bf16.msra.mxu0 0
    %853 = vmatprep.subr.bf16.mxu0 0
    %854 = vmatpush1.bf16.msra.mxu0 0
    %855 = vmatprep.subr.bf16.mxu0 0
    %856 = vmatpush1.bf16.msra.mxu0 0
    %857 = vmatprep.subr.bf16.mxu0 0
    %858 = vmatpush1.bf16.msra.mxu0 0
    %859 = vmatprep.subr.bf16.mxu0 0
    %860 = vmatpush1.bf16.msra.mxu0 0
    %861 = vmatprep.mubr.bf16.mxu0 0
    %862 = vmatmul.mubr.bf16.gmra.mrb[0].mxu0 %v216
    %v863 = vpop.f32.mrb[0].mxu0
    %v864 = vadd.f32 %v821, %v863
    %v865 = vpop.f32.mrb[0].mxu0
    %v866 = vadd.f32 %v823, %v865
    %v867 = vpop.f32.mrb[0].mxu0
    %v868 = vadd.f32 %v825, %v867
    %v869 = vpop.f32.mrb[0].mxu0
    %v870 = vadd.f32 %v827, %v869
    %871 = vdwg.mxu0
    %v872 = vpack.c.bf16 %v782, %v778
    %v873 = vpack.c.bf16 %v784, %v780
    %v874 = vpack.c.bf16 %v868, %v864
    %v875 = vpack.c.bf16 %v870, %v866
    %v876 = vmax.bf16 %v872, 0
    %v877 = vmax.bf16 %v873, 0
    %v878 = vmax.bf16 %v874, 0
    %v879 = vmax.bf16 %v875, 0
    %v880 = vld [vmem:[#allocation6] sm:$0xff]
    %v881 = vld [vmem:[#allocation6 + $0x8] sm:$0xff]
    %v882 = vld [vmem:[#allocation6 + $0x10] sm:$0xff]
    %v883 = vld [vmem:[#allocation6 + $0x18] sm:$0xff]
    %v884 = vld [vmem:[#allocation6 + $0x20] sm:$0xff]
    %v885 = vld [vmem:[#allocation6 + $0x28] sm:$0xff]
    %v886 = vld [vmem:[#allocation6 + $0x30] sm:$0xff]
    %v887 = vld [vmem:[#allocation6 + $0x38] sm:$0xff]
    %v888 = vld [vmem:[#allocation6 + $0x40] sm:$0xff]
    %v889 = vld [vmem:[#allocation6 + $0x48] sm:$0xff]
    %v890 = vld [vmem:[#allocation6 + $0x50] sm:$0xff]
    %v891 = vld [vmem:[#allocation6 + $0x58] sm:$0xff]
    %v892 = vld [vmem:[#allocation6 + $0x60] sm:$0xff]
    %v893 = vld [vmem:[#allocation6 + $0x68] sm:$0xff]
    %v894 = vld [vmem:[#allocation6 + $0x70] sm:$0xff]
    %v895 = vld [vmem:[#allocation6 + $0x78] sm:$0xff]
    %v896 = vld [vmem:[#allocation6 + $0x80] sm:$0xff]
    %v897 = vld [vmem:[#allocation6 + $0x88] sm:$0xff]
    %v898 = vld [vmem:[#allocation6 + $0x90] sm:$0xff]
    %v899 = vld [vmem:[#allocation6 + $0x98] sm:$0xff]
    %v900 = vld [vmem:[#allocation6 + $0xa0] sm:$0xff]
    %v901 = vld [vmem:[#allocation6 + $0xa8] sm:$0xff]
    %v902 = vld [vmem:[#allocation6 + $0xb0] sm:$0xff]
    %v903 = vld [vmem:[#allocation6 + $0xb8] sm:$0xff]
    %v904 = vld [vmem:[#allocation6 + $0xc0] sm:$0xff]
    %v905 = vld [vmem:[#allocation6 + $0xc8] sm:$0xff]
    %v906 = vld [vmem:[#allocation6 + $0xd0] sm:$0xff]
    %v907 = vld [vmem:[#allocation6 + $0xd8] sm:$0xff]
    %v908 = vld [vmem:[#allocation6 + $0xe0] sm:$0xff]
    %v909 = vld [vmem:[#allocation6 + $0xe8] sm:$0xff]
    %v910 = vld [vmem:[#allocation6 + $0xf0] sm:$0xff]
    %v911 = vld [vmem:[#allocation6 + $0xf8] sm:$0xff]
    %v912 = vld [vmem:[#allocation6 + $0x100] sm:$0xff]
    %v913 = vld [vmem:[#allocation6 + $0x108] sm:$0xff]
    %v914 = vld [vmem:[#allocation6 + $0x110] sm:$0xff]
    %v915 = vld [vmem:[#allocation6 + $0x118] sm:$0xff]
    %v916 = vld [vmem:[#allocation6 + $0x120] sm:$0xff]
    %v917 = vld [vmem:[#allocation6 + $0x128] sm:$0xff]
    %v918 = vld [vmem:[#allocation6 + $0x130] sm:$0xff]
    %v919 = vld [vmem:[#allocation6 + $0x138] sm:$0xff]
    %v920 = vld [vmem:[#allocation6 + $0x140] sm:$0xff]
    %v921 = vld [vmem:[#allocation6 + $0x148] sm:$0xff]
    %v922 = vld [vmem:[#allocation6 + $0x150] sm:$0xff]
    %v923 = vld [vmem:[#allocation6 + $0x158] sm:$0xff]
    %v924 = vld [vmem:[#allocation6 + $0x160] sm:$0xff]
    %v925 = vld [vmem:[#allocation6 + $0x168] sm:$0xff]
    %v926 = vld [vmem:[#allocation6 + $0x170] sm:$0xff]
    %v927 = vld [vmem:[#allocation6 + $0x178] sm:$0xff]
    %v928 = vld [vmem:[#allocation6 + $0x180] sm:$0xff]
    %v929 = vld [vmem:[#allocation6 + $0x188] sm:$0xff]
    %v930 = vld [vmem:[#allocation6 + $0x190] sm:$0xff]
    %v931 = vld [vmem:[#allocation6 + $0x198] sm:$0xff]
    %v932 = vld [vmem:[#allocation6 + $0x1a0] sm:$0xff]
    %v933 = vld [vmem:[#allocation6 + $0x1a8] sm:$0xff]
    %v934 = vld [vmem:[#allocation6 + $0x1b0] sm:$0xff]
    %v935 = vld [vmem:[#allocation6 + $0x1b8] sm:$0xff]
    %v936 = vld [vmem:[#allocation6 + $0x1c0] sm:$0xff]
    %v937 = vld [vmem:[#allocation6 + $0x1c8] sm:$0xff]
    %v938 = vld [vmem:[#allocation6 + $0x1d0] sm:$0xff]
    %v939 = vld [vmem:[#allocation6 + $0x1d8] sm:$0xff]
    %v940 = vld [vmem:[#allocation6 + $0x1e0] sm:$0xff]
    %v941 = vld [vmem:[#allocation6 + $0x1e8] sm:$0xff]
    %v942 = vld [vmem:[#allocation6 + $0x1f0] sm:$0xff]
    %v943 = vld [vmem:[#allocation6 + $0x1f8] sm:$0xff]
    %v944 = vld [vmem:[%s4] sm:$0x3]
    %v946 = vlaneseq
    %v947 = vshrl.u32 %v946, 7
    %v948 = vsub.s32 0, %v947
    %v949 = vrot.slane %v944, %v948
    %v950 = vlaneseq
    %v951 = vshrl.u32 %v950, 7
    %v952 = vsub.s32 1, %v951
    %v953 = vrot.slane %v944, %v952
    %v1020 = vunpack.c.l.b16 %v880
    %v1021 = vunpack.c.h.b16 %v880
    %v1022 = vunpack.c.l.b16 %v881
    %v1023 = vunpack.c.h.b16 %v881
    %v1024 = vunpack.c.l.b16 %v882
    %v1025 = vunpack.c.h.b16 %v882
    %v1026 = vunpack.c.l.b16 %v883
    %v1027 = vunpack.c.h.b16 %v883
    %v1028 = vunpack.c.l.b16 %v884
    %v1029 = vunpack.c.h.b16 %v884
    %v1030 = vunpack.c.l.b16 %v885
    %v1031 = vunpack.c.h.b16 %v885
    %v1032 = vunpack.c.l.b16 %v886
    %v1033 = vunpack.c.h.b16 %v886
    %v1034 = vunpack.c.l.b16 %v887
    %v1035 = vunpack.c.h.b16 %v887
    %v1036 = vunpack.c.l.b16 %v888
    %v1037 = vunpack.c.h.b16 %v888
    %v1038 = vunpack.c.l.b16 %v889
    %v1039 = vunpack.c.h.b16 %v889
    %v1040 = vunpack.c.l.b16 %v890
    %v1041 = vunpack.c.h.b16 %v890
    %v1042 = vunpack.c.l.b16 %v891
    %v1043 = vunpack.c.h.b16 %v891
    %v1044 = vunpack.c.l.b16 %v892
    %v1045 = vunpack.c.h.b16 %v892
    %v1046 = vunpack.c.l.b16 %v893
    %v1047 = vunpack.c.h.b16 %v893
    %v1048 = vunpack.c.l.b16 %v894
    %v1049 = vunpack.c.h.b16 %v894
    %v1050 = vunpack.c.l.b16 %v895
    %v1051 = vunpack.c.h.b16 %v895
    %v1052 = vunpack.c.l.b16 %v896
    %v1053 = vunpack.c.h.b16 %v896
    %v1054 = vunpack.c.l.b16 %v897
    %v1055 = vunpack.c.h.b16 %v897
    %v1056 = vunpack.c.l.b16 %v898
    %v1057 = vunpack.c.h.b16 %v898
    %v1058 = vunpack.c.l.b16 %v899
    %v1059 = vunpack.c.h.b16 %v899
    %v1060 = vunpack.c.l.b16 %v900
    %v1061 = vunpack.c.h.b16 %v900
    %v1062 = vunpack.c.l.b16 %v901
    %v1063 = vunpack.c.h.b16 %v901
    %v1064 = vunpack.c.l.b16 %v902
    %v1065 = vunpack.c.h.b16 %v902
    %v1066 = vunpack.c.l.b16 %v903
    %v1067 = vunpack.c.h.b16 %v903
    %v1068 = vunpack.c.l.b16 %v904
    %v1069 = vunpack.c.h.b16 %v904
    %v1070 = vunpack.c.l.b16 %v905
    %v1071 = vunpack.c.h.b16 %v905
    %v1072 = vunpack.c.l.b16 %v906
    %v1073 = vunpack.c.h.b16 %v906
    %v1074 = vunpack.c.l.b16 %v907
    %v1075 = vunpack.c.h.b16 %v907
    %v1076 = vunpack.c.l.b16 %v908
    %v1077 = vunpack.c.h.b16 %v908
    %v1078 = vunpack.c.l.b16 %v909
    %v1079 = vunpack.c.h.b16 %v909
    %v1080 = vunpack.c.l.b16 %v910
    %v1081 = vunpack.c.h.b16 %v910
    %v1082 = vunpack.c.l.b16 %v911
    %v1083 = vunpack.c.h.b16 %v911
    %v1084 = vunpack.c.l.b16 %v912
    %v1085 = vunpack.c.h.b16 %v912
    %v1086 = vunpack.c.l.b16 %v913
    %v1087 = vunpack.c.h.b16 %v913
    %v1088 = vunpack.c.l.b16 %v914
    %v1089 = vunpack.c.h.b16 %v914
    %v1090 = vunpack.c.l.b16 %v915
    %v1091 = vunpack.c.h.b16 %v915
    %v1092 = vunpack.c.l.b16 %v916
    %v1093 = vunpack.c.h.b16 %v916
    %v1094 = vunpack.c.l.b16 %v917
    %v1095 = vunpack.c.h.b16 %v917
    %v1096 = vunpack.c.l.b16 %v918
    %v1097 = vunpack.c.h.b16 %v918
    %v1098 = vunpack.c.l.b16 %v919
    %v1099 = vunpack.c.h.b16 %v919
    %v1100 = vunpack.c.l.b16 %v920
    %v1101 = vunpack.c.h.b16 %v920
    %v1102 = vunpack.c.l.b16 %v921
    %v1103 = vunpack.c.h.b16 %v921
    %v1104 = vunpack.c.l.b16 %v922
    %v1105 = vunpack.c.h.b16 %v922
    %v1106 = vunpack.c.l.b16 %v923
    %v1107 = vunpack.c.h.b16 %v923
    %v1108 = vunpack.c.l.b16 %v924
    %v1109 = vunpack.c.h.b16 %v924
    %v1110 = vunpack.c.l.b16 %v925
    %v1111 = vunpack.c.h.b16 %v925
    %v1112 = vunpack.c.l.b16 %v926
    %v1113 = vunpack.c.h.b16 %v926
    %v1114 = vunpack.c.l.b16 %v927
    %v1115 = vunpack.c.h.b16 %v927
    %v1116 = vunpack.c.l.b16 %v928
    %v1117 = vunpack.c.h.b16 %v928
    %v1118 = vunpack.c.l.b16 %v929
    %v1119 = vunpack.c.h.b16 %v929
    %v1120 = vunpack.c.l.b16 %v930
    %v1121 = vunpack.c.h.b16 %v930
    %v1122 = vunpack.c.l.b16 %v931
    %v1123 = vunpack.c.h.b16 %v931
    %v1124 = vunpack.c.l.b16 %v932
    %v1125 = vunpack.c.h.b16 %v932
    %v1126 = vunpack.c.l.b16 %v933
    %v1127 = vunpack.c.h.b16 %v933
    %v1128 = vunpack.c.l.b16 %v934
    %v1129 = vunpack.c.h.b16 %v934
    %v1130 = vunpack.c.l.b16 %v935
    %v1131 = vunpack.c.h.b16 %v935
    %v1132 = vunpack.c.l.b16 %v936
    %v1133 = vunpack.c.h.b16 %v936
    %v1134 = vunpack.c.l.b16 %v937
    %v1135 = vunpack.c.h.b16 %v937
    %v1136 = vunpack.c.l.b16 %v938
    %v1137 = vunpack.c.h.b16 %v938
    %v1138 = vunpack.c.l.b16 %v939
    %v1139 = vunpack.c.h.b16 %v939
    %v1140 = vunpack.c.l.b16 %v940
    %v1141 = vunpack.c.h.b16 %v940
    %v1142 = vunpack.c.l.b16 %v941
    %v1143 = vunpack.c.h.b16 %v941
    %v1144 = vunpack.c.l.b16 %v942
    %v1145 = vunpack.c.h.b16 %v942
    %v1146 = vunpack.c.l.b16 %v943
    %v1147 = vunpack.c.h.b16 %v943
    %v1148 = vpack.c.b16 %v1022, %v1020
    %v1149 = vpack.c.b16 %v1023, %v1021
    %v1150 = vpack.c.b16 %v1026, %v1024
    %v1151 = vpack.c.b16 %v1027, %v1025
    %v1152 = vpack.c.b16 %v1030, %v1028
    %v1153 = vpack.c.b16 %v1031, %v1029
    %v1154 = vpack.c.b16 %v1034, %v1032
    %v1155 = vpack.c.b16 %v1035, %v1033
    %v1156 = vpack.c.b16 %v1038, %v1036
    %v1157 = vpack.c.b16 %v1039, %v1037
    %v1158 = vpack.c.b16 %v1042, %v1040
    %v1159 = vpack.c.b16 %v1043, %v1041
    %v1160 = vpack.c.b16 %v1046, %v1044
    %v1161 = vpack.c.b16 %v1047, %v1045
    %v1162 = vpack.c.b16 %v1050, %v1048
    %v1163 = vpack.c.b16 %v1051, %v1049
    %v1164 = vpack.c.b16 %v1054, %v1052
    %v1165 = vpack.c.b16 %v1055, %v1053
    %v1166 = vpack.c.b16 %v1058, %v1056
    %v1167 = vpack.c.b16 %v1059, %v1057
    %v1168 = vpack.c.b16 %v1062, %v1060
    %v1169 = vpack.c.b16 %v1063, %v1061
    %v1170 = vpack.c.b16 %v1066, %v1064
    %v1171 = vpack.c.b16 %v1067, %v1065
    %v1172 = vpack.c.b16 %v1070, %v1068
    %v1173 = vpack.c.b16 %v1071, %v1069
    %v1174 = vpack.c.b16 %v1074, %v1072
    %v1175 = vpack.c.b16 %v1075, %v1073
    %v1176 = vpack.c.b16 %v1078, %v1076
    %v1177 = vpack.c.b16 %v1079, %v1077
    %v1178 = vpack.c.b16 %v1082, %v1080
    %v1179 = vpack.c.b16 %v1083, %v1081
    %v1180 = vpack.c.b16 %v1086, %v1084
    %v1181 = vpack.c.b16 %v1087, %v1085
    %v1182 = vpack.c.b16 %v1090, %v1088
    %v1183 = vpack.c.b16 %v1091, %v1089
    %v1184 = vpack.c.b16 %v1094, %v1092
    %v1185 = vpack.c.b16 %v1095, %v1093
    %v1186 = vpack.c.b16 %v1098, %v1096
    %v1187 = vpack.c.b16 %v1099, %v1097
    %v1188 = vpack.c.b16 %v1102, %v1100
    %v1189 = vpack.c.b16 %v1103, %v1101
    %v1190 = vpack.c.b16 %v1106, %v1104
    %v1191 = vpack.c.b16 %v1107, %v1105
    %v1192 = vpack.c.b16 %v1110, %v1108
    %v1193 = vpack.c.b16 %v1111, %v1109
    %v1194 = vpack.c.b16 %v1114, %v1112
    %v1195 = vpack.c.b16 %v1115, %v1113
    %v1196 = vpack.c.b16 %v1118, %v1116
    %v1197 = vpack.c.b16 %v1119, %v1117
    %v1198 = vpack.c.b16 %v1122, %v1120
    %v1199 = vpack.c.b16 %v1123, %v1121
    %v1200 = vpack.c.b16 %v1126, %v1124
    %v1201 = vpack.c.b16 %v1127, %v1125
    %v1202 = vpack.c.b16 %v1130, %v1128
    %v1203 = vpack.c.b16 %v1131, %v1129
    %v1204 = vpack.c.b16 %v1134, %v1132
    %v1205 = vpack.c.b16 %v1135, %v1133
    %v1206 = vpack.c.b16 %v1138, %v1136
    %v1207 = vpack.c.b16 %v1139, %v1137
    %v1208 = vpack.c.b16 %v1142, %v1140
    %v1209 = vpack.c.b16 %v1143, %v1141
    %v1210 = vpack.c.b16 %v1146, %v1144
    %v1211 = vpack.c.b16 %v1147, %v1145
    %1276 = vmatprep.subr.bf16.mxu0 %v1149
    %1277 = vmatpush1.bf16.msra.mxu0 %v1148
    %1278 = vmatprep.subr.bf16.mxu0 %v1151
    %1279 = vmatpush1.bf16.msra.mxu0 %v1150
    %1280 = vmatprep.subr.bf16.mxu0 %v1153
    %1281 = vmatpush1.bf16.msra.mxu0 %v1152
    %1282 = vmatprep.subr.bf16.mxu0 %v1155
    %1283 = vmatpush1.bf16.msra.mxu0 %v1154
    %1284 = vmatprep.subr.bf16.mxu0 %v1157
    %1285 = vmatpush1.bf16.msra.mxu0 %v1156
    %1286 = vmatprep.subr.bf16.mxu0 %v1159
    %1287 = vmatpush1.bf16.msra.mxu0 %v1158
    %1288 = vmatprep.subr.bf16.mxu0 %v1161
    %1289 = vmatpush1.bf16.msra.mxu0 %v1160
    %1290 = vmatprep.subr.bf16.mxu0 %v1163
    %1291 = vmatpush1.bf16.msra.mxu0 %v1162
    %1292 = vmatprep.subr.bf16.mxu0 %v1165
    %1293 = vmatpush1.bf16.msra.mxu0 %v1164
    %1294 = vmatprep.subr.bf16.mxu0 %v1167
    %1295 = vmatpush1.bf16.msra.mxu0 %v1166
    %1296 = vmatprep.subr.bf16.mxu0 %v1169
    %1297 = vmatpush1.bf16.msra.mxu0 %v1168
    %1298 = vmatprep.subr.bf16.mxu0 %v1171
    %1299 = vmatpush1.bf16.msra.mxu0 %v1170
    %1300 = vmatprep.subr.bf16.mxu0 %v1173
    %1301 = vmatpush1.bf16.msra.mxu0 %v1172
    %1302 = vmatprep.subr.bf16.mxu0 %v1175
    %1303 = vmatpush1.bf16.msra.mxu0 %v1174
    %1304 = vmatprep.subr.bf16.mxu0 %v1177
    %1305 = vmatpush1.bf16.msra.mxu0 %v1176
    %1306 = vmatprep.subr.bf16.mxu0 %v1179
    %1307 = vmatpush1.bf16.msra.mxu0 %v1178
    %1308 = vmatprep.mubr.bf16.mxu0 %v877
    %1309 = vmatmul.mubr.bf16.gmra.mrb[0].mxu0 %v876
    %v1310 = vpop.f32.mrb[0].mxu0
    %v1311 = vadd.f32 %v949, %v1310
    %v1312 = vpop.f32.mrb[0].mxu0
    %v1313 = vadd.f32 %v953, %v1312
    %v1314 = vpop.f32.mrb[0].mxu0
    %v1315 = vadd.f32 %v949, %v1314
    %v1316 = vpop.f32.mrb[0].mxu0
    %v1317 = vadd.f32 %v953, %v1316
    %1318 = vdwg.mxu0
    %1319 = vmatprep.subr.bf16.mxu0 %v1181
    %1320 = vmatpush1.bf16.msra.mxu0 %v1180
    %1321 = vmatprep.subr.bf16.mxu0 %v1183
    %1322 = vmatpush1.bf16.msra.mxu0 %v1182
    %1323 = vmatprep.subr.bf16.mxu0 %v1185
    %1324 = vmatpush1.bf16.msra.mxu0 %v1184
    %1325 = vmatprep.subr.bf16.mxu0 %v1187
    %1326 = vmatpush1.bf16.msra.mxu0 %v1186
    %1327 = vmatprep.subr.bf16.mxu0 %v1189
    %1328 = vmatpush1.bf16.msra.mxu0 %v1188
    %1329 = vmatprep.subr.bf16.mxu0 %v1191
    %1330 = vmatpush1.bf16.msra.mxu0 %v1190
    %1331 = vmatprep.subr.bf16.mxu0 %v1193
    %1332 = vmatpush1.bf16.msra.mxu0 %v1192
    %1333 = vmatprep.subr.bf16.mxu0 %v1195
    %1334 = vmatpush1.bf16.msra.mxu0 %v1194
    %1335 = vmatprep.subr.bf16.mxu0 %v1197
    %1336 = vmatpush1.bf16.msra.mxu0 %v1196
    %1337 = vmatprep.subr.bf16.mxu0 %v1199
    %1338 = vmatpush1.bf16.msra.mxu0 %v1198
    %1339 = vmatprep.subr.bf16.mxu0 %v1201
    %1340 = vmatpush1.bf16.msra.mxu0 %v1200
    %1341 = vmatprep.subr.bf16.mxu0 %v1203
    %1342 = vmatpush1.bf16.msra.mxu0 %v1202
    %1343 = vmatprep.subr.bf16.mxu0 %v1205
    %1344 = vmatpush1.bf16.msra.mxu0 %v1204
    %1345 = vmatprep.subr.bf16.mxu0 %v1207
    %1346 = vmatpush1.bf16.msra.mxu0 %v1206
    %1347 = vmatprep.subr.bf16.mxu0 %v1209
    %1348 = vmatpush1.bf16.msra.mxu0 %v1208
    %1349 = vmatprep.subr.bf16.mxu0 %v1211
    %1350 = vmatpush1.bf16.msra.mxu0 %v1210
    %1351 = vmatprep.mubr.bf16.mxu0 %v879
    %1352 = vmatmul.mubr.bf16.gmra.mrb[0].mxu0 %v878
    %v1353 = vpop.f32.mrb[0].mxu0
    %v1354 = vadd.f32 %v1311, %v1353
    %v1355 = vpop.f32.mrb[0].mxu0
    %v1356 = vadd.f32 %v1313, %v1355
    %v1357 = vpop.f32.mrb[0].mxu0
    %v1358 = vadd.f32 %v1315, %v1357
    %v1359 = vpop.f32.mrb[0].mxu0
    %v1360 = vadd.f32 %v1317, %v1359
    %1361 = vdwg.mxu0
    %v1362 = vpack.c.bf16 %v1358, %v1354
    %v1363 = vpack.c.bf16 %v1360, %v1356
    %v1364 = vmax.bf16 %v1362, 0
    %v1365 = vmax.bf16 %v1363, 0
    %v1366 = vld [vmem:[#allocation7] sm:$0xf]
    %v1367 = vld [vmem:[#allocation7 + $0x4] sm:$0xf]
    %v1368 = vld [vmem:[#allocation7 + $0x8] sm:$0xf]
    %v1369 = vld [vmem:[#allocation7 + $0xc] sm:$0xf]
    %v1370 = vld [vmem:[#allocation7 + $0x10] sm:$0xf]
    %v1371 = vld [vmem:[#allocation7 + $0x14] sm:$0xf]
    %v1372 = vld [vmem:[#allocation7 + $0x18] sm:$0xf]
    %v1373 = vld [vmem:[#allocation7 + $0x1c] sm:$0xf]
    %v1374 = vld [vmem:[#allocation7 + $0x20] sm:$0xf]
    %v1375 = vld [vmem:[#allocation7 + $0x24] sm:$0xf]
    %v1376 = vld [vmem:[#allocation7 + $0x28] sm:$0xf]
    %v1377 = vld [vmem:[#allocation7 + $0x2c] sm:$0xf]
    %v1378 = vld [vmem:[#allocation7 + $0x30] sm:$0xf]
    %v1379 = vld [vmem:[#allocation7 + $0x34] sm:$0xf]
    %v1380 = vld [vmem:[#allocation7 + $0x38] sm:$0xf]
    %v1381 = vld [vmem:[#allocation7 + $0x3c] sm:$0xf]
    %v1382 = vld [vmem:[#allocation7 + $0x40] sm:$0xf]
    %v1383 = vld [vmem:[#allocation7 + $0x44] sm:$0xf]
    %v1384 = vld [vmem:[#allocation7 + $0x48] sm:$0xf]
    %v1385 = vld [vmem:[#allocation7 + $0x4c] sm:$0xf]
    %v1386 = vld [vmem:[#allocation7 + $0x50] sm:$0xf]
    %v1387 = vld [vmem:[#allocation7 + $0x54] sm:$0xf]
    %v1388 = vld [vmem:[#allocation7 + $0x58] sm:$0xf]
    %v1389 = vld [vmem:[#allocation7 + $0x5c] sm:$0xf]
    %v1390 = vld [vmem:[#allocation7 + $0x60] sm:$0xf]
    %v1391 = vld [vmem:[#allocation7 + $0x64] sm:$0xf]
    %v1392 = vld [vmem:[#allocation7 + $0x68] sm:$0xf]
    %v1393 = vld [vmem:[#allocation7 + $0x6c] sm:$0xf]
    %v1394 = vld [vmem:[#allocation7 + $0x70] sm:$0xf]
    %v1395 = vld [vmem:[#allocation7 + $0x74] sm:$0xf]
    %v1396 = vld [vmem:[#allocation7 + $0x78] sm:$0xf]
    %v1397 = vld [vmem:[#allocation7 + $0x7c] sm:$0xf]
    %v1398 = vld [vmem:[%s6] sm:$0x1]
    %v1400 = vlaneseq
    %v1401 = vshrl.u32 %v1400, 7
    %v1402 = vsub.s32 0, %v1401
    %v1403 = vrot.slane %v1398, %v1402
    %v1437 = vunpack.c.l.b16 %v1366
    %v1438 = vunpack.c.l.b16 %v1367
    %v1439 = vunpack.c.l.b16 %v1368
    %v1440 = vunpack.c.l.b16 %v1369
    %v1441 = vunpack.c.l.b16 %v1370
    %v1442 = vunpack.c.l.b16 %v1371
    %v1443 = vunpack.c.l.b16 %v1372
    %v1444 = vunpack.c.l.b16 %v1373
    %v1445 = vunpack.c.l.b16 %v1374
    %v1446 = vunpack.c.l.b16 %v1375
    %v1447 = vunpack.c.l.b16 %v1376
    %v1448 = vunpack.c.l.b16 %v1377
    %v1449 = vunpack.c.l.b16 %v1378
    %v1450 = vunpack.c.l.b16 %v1379
    %v1451 = vunpack.c.l.b16 %v1380
    %v1452 = vunpack.c.l.b16 %v1381
    %v1453 = vunpack.c.l.b16 %v1382
    %v1454 = vunpack.c.l.b16 %v1383
    %v1455 = vunpack.c.l.b16 %v1384
    %v1456 = vunpack.c.l.b16 %v1385
    %v1457 = vunpack.c.l.b16 %v1386
    %v1458 = vunpack.c.l.b16 %v1387
    %v1459 = vunpack.c.l.b16 %v1388
    %v1460 = vunpack.c.l.b16 %v1389
    %v1461 = vunpack.c.l.b16 %v1390
    %v1462 = vunpack.c.l.b16 %v1391
    %v1463 = vunpack.c.l.b16 %v1392
    %v1464 = vunpack.c.l.b16 %v1393
    %v1465 = vunpack.c.l.b16 %v1394
    %v1466 = vunpack.c.l.b16 %v1395
    %v1467 = vunpack.c.l.b16 %v1396
    %v1468 = vunpack.c.l.b16 %v1397
    %v1469 = vpack.c.b16 %v1438, %v1437
    %v1470 = vpack.c.b16 %v1440, %v1439
    %v1471 = vpack.c.b16 %v1442, %v1441
    %v1472 = vpack.c.b16 %v1444, %v1443
    %v1473 = vpack.c.b16 %v1446, %v1445
    %v1474 = vpack.c.b16 %v1448, %v1447
    %v1475 = vpack.c.b16 %v1450, %v1449
    %v1476 = vpack.c.b16 %v1452, %v1451
    %v1477 = vpack.c.b16 %v1454, %v1453
    %v1478 = vpack.c.b16 %v1456, %v1455
    %v1479 = vpack.c.b16 %v1458, %v1457
    %v1480 = vpack.c.b16 %v1460, %v1459
    %v1481 = vpack.c.b16 %v1462, %v1461
    %v1482 = vpack.c.b16 %v1464, %v1463
    %v1483 = vpack.c.b16 %v1466, %v1465
    %v1484 = vpack.c.b16 %v1468, %v1467
    %1501 = vmatprep.subr.bf16.mxu0 0
    %1502 = vmatpush1.bf16.msra.mxu0 %v1469
    %1503 = vmatprep.subr.bf16.mxu0 0
    %1504 = vmatpush1.bf16.msra.mxu0 %v1470
    %1505 = vmatprep.subr.bf16.mxu0 0
    %1506 = vmatpush1.bf16.msra.mxu0 %v1471
    %1507 = vmatprep.subr.bf16.mxu0 0
    %1508 = vmatpush1.bf16.msra.mxu0 %v1472
    %1509 = vmatprep.subr.bf16.mxu0 0
    %1510 = vmatpush1.bf16.msra.mxu0 %v1473
    %1511 = vmatprep.subr.bf16.mxu0 0
    %1512 = vmatpush1.bf16.msra.mxu0 %v1474
    %1513 = vmatprep.subr.bf16.mxu0 0
    %1514 = vmatpush1.bf16.msra.mxu0 %v1475
    %1515 = vmatprep.subr.bf16.mxu0 0
    %1516 = vmatpush1.bf16.msra.mxu0 %v1476
    %1517 = vmatprep.subr.bf16.mxu0 0
    %1518 = vmatpush1.bf16.msra.mxu0 %v1477
    %1519 = vmatprep.subr.bf16.mxu0 0
    %1520 = vmatpush1.bf16.msra.mxu0 %v1478
    %1521 = vmatprep.subr.bf16.mxu0 0
    %1522 = vmatpush1.bf16.msra.mxu0 %v1479
    %1523 = vmatprep.subr.bf16.mxu0 0
    %1524 = vmatpush1.bf16.msra.mxu0 %v1480
    %1525 = vmatprep.subr.bf16.mxu0 0
    %1526 = vmatpush1.bf16.msra.mxu0 %v1481
    %1527 = vmatprep.subr.bf16.mxu0 0
    %1528 = vmatpush1.bf16.msra.mxu0 %v1482
    %1529 = vmatprep.subr.bf16.mxu0 0
    %1530 = vmatpush1.bf16.msra.mxu0 %v1483
    %1531 = vmatprep.subr.bf16.mxu0 0
    %1532 = vmatpush1.bf16.msra.mxu0 %v1484
    %1533 = vmatprep.mubr.bf16.mxu0 %v1365
    %1534 = vmatmul.mubr.bf16.gmra.mrb[0].mxu0 %v1364
    %v1535 = vpop.f32.mrb[0].mxu0
    %v1536 = vadd.f32 %v1403, %v1535
    %v1537 = vpop.f32.mrb[0].mxu0
    %v1538 = vpop.f32.mrb[0].mxu0
    %v1539 = vadd.f32 %v1403, %v1538
    %v1540 = vpop.f32.mrb[0].mxu0
    %1541 = vdwg.mxu0
    %v1542 = vpack.c.bf16 %v1539, %v1536
    %v1544 = vunpack.c.l.b16 %v1542
    %v1545 = vunpack.c.h.b16 %v1542
    %v1546 = vpack.c.b16 %v1544, %v1544
    %v1547 = vpack.c.b16 %v1545, %v1545
    %1550 = vst [vmem:[%s7] sm:$0xf] %v1546
    %1551 = vst [vmem:[%s7 + $0x4] sm:$0xf] %v1547
    // Predicated region
    $region46: #{embedding_classifier_forward.1} parent=1 // pred_check
      _
    $region47: #{embedding_classifier_forward.1} parent=1 // pred_check_branch
      %1553 = sbr.rel (0) target = $region49
    $region48: #{embedding_classifier_forward.1} parent=1 // pred_region
      _
    $region49: #{embedding_classifier_forward.1} parent=1 // pred_fallthru
      _
    // Predicated region
    $region50: #{embedding_classifier_forward.1} parent=1 // pred_check
      _
    $region51: #{embedding_classifier_forward.1} parent=1 // pred_check_branch
      %1555 = sbr.rel (0) target = $region53
    $region52: #{embedding_classifier_forward.1} parent=1 // pred_region
      _
    $region53: #{embedding_classifier_forward.1} parent=1 // pred_fallthru
      _
    %1556 = vsyncpa [#allocation3], 1
    %1557 = vsyncpa [#allocation5], 1
    %1558 = vsyncpa [#allocation8], 1

</llo_original>
